<compile_context>
chip_gen: v6e
topology: v6e:2x2x1
jax: 0.10.0
libtpu: 0.0.40
codegen_flags: <defaults>
</compile_context>

<pallas_src>
import numpy as np

import jax
import jax.numpy as jnp
from jax.experimental import pallas as pl
from jax.experimental.pallas import tpu as pltpu


# ---------------------------------------------------------------------------
# Kernels
# ---------------------------------------------------------------------------
def _banded_kernel(body_ref, halo_ref, w_ref, b_ref, o_ref):
    """One fused MXU matmul per strip; output written lane-dense, no reshape.

    body_ref: (1, TH, WpC)     rows [s*TH, s*TH+TH) of the padded input,
                               lanes = flattened (padded-col, ci)
    halo_ref: (1, 8, WpC)      rows [(s+1)*TH, (s+1)*TH+8); only rows 0..1 used
    w_ref   : (3*WpC, 4*W*C)   block-banded folded weights, rows (k, p, ci),
                               cols (a, j, b, co)
    b_ref   : (1, 4*W*C)       bias tiled over (a, j, b)
    o_ref   : (1, TH, 4*W*C)
    """
    th = body_ref.shape[1]
    # (TH+2, WpC) window of the padded original-resolution input.
    x = jnp.concatenate([body_ref[0], halo_ref[0, 0:2]], axis=0)
    # Row taps k=0..2 side by side -> (TH, 3*WpC); column taps live in w_ref.
    lhs = jnp.concatenate([x[0:th], x[1:th + 1], x[2:th + 2]], axis=1)
    res = jnp.dot(lhs.astype(w_ref.dtype), w_ref[...],
                  preferred_element_type=jnp.float32)
    res = res + b_ref[...]
    o_ref[0] = res.astype(o_ref.dtype)


def _im2col_kernel(body_ref, halo_ref, w_ref, b_ref, o_ref):
    """Fallback for large W*C: single fused 9-tap im2col matmul per strip.

    body_ref: (1, TH, W+2, C); halo_ref: (1, 2, W+2, C)
    w_ref   : (9*C, 4*Co)   rows (g, s, ci), cols (a, b, co)
    b_ref   : (1, 4*Co)
    o_ref   : (1, 2, TH, 2*W*Co)  row-phase major, lane-dense last dim
    """
    th, wp, c = body_ref.shape[1], body_ref.shape[2], body_ref.shape[3]
    w = wp - 2
    co = w_ref.shape[1] // 4
    xs = jnp.concatenate([body_ref[0], halo_ref[0]], axis=0)      # (TH+2, W+2, C)
    cols = [xs[g:g + th, s:s + w, :].reshape(th * w, c)
            for g in range(3) for s in range(3)]
    lhs = jnp.concatenate(cols, axis=-1)                           # (TH*W, 9C)
    res = jnp.dot(lhs.astype(w_ref.dtype), w_ref[...],
                  preferred_element_type=jnp.float32)
    res = res + b_ref[...]                                         # (TH*W, 4Co)
    for a in range(2):
        # (TH*W, 2Co) -> (TH, 2W*Co): lane-dense slab for output row-phase a.
        o_ref[0, a] = res[:, a * 2 * co:(a + 1) * 2 * co].reshape(
            th, 2 * w * co).astype(o_ref.dtype)


# ---------------------------------------------------------------------------
# Weight folding (upsample + pad + 3x3 taps -> single matmul RHS)
# ---------------------------------------------------------------------------
def _fold_weights_banded(weight, w_img):
    """(Co, Ci, 3, 3) -> (3*(W+2)*Ci, 4*W*Co) block-banded matrix.

    Rows ordered (k, p, ci): k = source-row tap (0..2), p = padded source col.
    Cols ordered (a, j, b, co): a/b = output row/col phase, j = output col pair.
    """
    wp = w_img + 2
    sel = np.zeros((3, wp, 2, w_img, 2, 3, 3), dtype=np.float32)
    for a in range(2):
        for dy in range(3):
            k = (a + dy + 1) // 2
            for b in range(2):
                for dx in range(3):
                    s = (b + dx + 1) // 2
                    for j in range(w_img):
                        sel[k, j + s, a, j, b, dy, dx] = 1.0
    wb = jnp.einsum("kpajbyx,oiyx->kpiajbo", jnp.asarray(sel),
                    weight.astype(jnp.float32))
    c_out, c_in = weight.shape[0], weight.shape[1]
    return wb.reshape(3 * wp * c_in, 4 * w_img * c_out)


def _fold_weights_im2col(weight):
    """(Co, Ci, 3, 3) -> (9*Ci, 4*Co): rows (g, s, ci), cols (a, b, co)."""
    sel = np.zeros((3, 3, 2, 2, 3, 3), dtype=np.float32)
    for a in range(2):
        for dy in range(3):
            g = (a + dy + 1) // 2
            for b in range(2):
                for dx in range(3):
                    s = (b + dx + 1) // 2
                    sel[g, s, a, b, dy, dx] = 1.0
    wf = jnp.einsum("gsabyx,oiyx->gsiabo", jnp.asarray(sel),
                    weight.astype(jnp.float32))
    c_out, c_in = weight.shape[0], weight.shape[1]
    return wf.reshape(9 * c_in, 4 * c_out)


# ---------------------------------------------------------------------------
# Tiling
# ---------------------------------------------------------------------------
def _round_up(v, m):
    return ((v + m - 1) // m) * m


def _pick_strip_rows(h_eff, w, c, n, vmem_budget_bytes=8 << 20):
    """Largest TH (multiple of 8 dividing h_eff) that fits the VMEM budget.

    Only force >= 2 strips when N == 1 (keeps a second parallel grid axis for
    dual-TensorCore parts); on N >= 2 the batch axis already provides it, so
    the largest strip (fewest grid steps) wins on single-TC v5e/v6e.
    """
    # rough f32 bytes per output row-pair: double-buffered in/out blocks + temps
    per_row = 4 * (8 * (w + 2) * c + 20 * w * c)
    cands = [d for d in range(8, h_eff, 8) if h_eff % d == 0] + [h_eff]
    fits = [d for d in cands if d * per_row <= vmem_budget_bytes] or [cands[0]]
    if n == 1:
        multi = [d for d in fits if h_eff // d >= 2]
        if multi:
            return max(multi)
    return max(fits)


# ---------------------------------------------------------------------------
# Wrapper
# ---------------------------------------------------------------------------
def upsample_forward(x_nchw, weight, bias, *, compute_dtype=jnp.float32,
                     force_path=None):
    """UpSample.forward: nearest 2x upsample + Conv2d(3x3, stride=1, pad=1).

    x_nchw: (N, C, H, W); weight: (Co, C, 3, 3); bias: (Co,) -> (N, Co, 2H, 2W).
    compute_dtype: dtype of the MXU operands (f32 for exact parity, bf16 for
    full-rate MXU with f32 accumulation).
    """
    n, c, h, w = x_nchw.shape
    c_out = weight.shape[0]
    h_eff = _round_up(h, 8)            # extra rows compute on zeros, trimmed below
    th = _pick_strip_rows(h_eff, w, max(c, c_out), n)
    num_strips = h_eff // th

    # NCHW -> NHWC (channels on lanes); the zero pad below fuses with this
    # transpose into a single XLA pass over the (small, original-res) input.
    # TODO(synk): drop this pre-pass entirely (in-kernel border handling via a
    # manual-DMA window) and optionally store it as bf16 to halve input HBM bytes.
    x_nhwc = jnp.transpose(x_nchw, (0, 2, 3, 1))

    itemsize = jnp.dtype(compute_dtype).itemsize
    banded_w_bytes = 3 * (w + 2) * c * 4 * w * c_out * itemsize
    use_banded = banded_w_bytes <= (2 << 20)          # banded weight is O(W^2*C^2)
    if force_path == "banded":
        use_banded = True
    elif force_path == "im2col":
        use_banded = False

    params = pltpu.CompilerParams(dimension_semantics=("parallel", "parallel"))

    if use_banded:
        # ---- banded path: one matmul per strip, output already lane-dense ----
        # Pad: 1 row on top, (h_eff - h + 7) rows below (the 8-row halo block of
        # the last strip must stay in bounds), 1 col each side; flatten (W+2, C)
        # onto the lane axis so row slabs are lane-dense.
        xp = jnp.pad(x_nhwc, ((0, 0), (1, h_eff - h + 7), (1, 1), (0, 0)))
        xp = xp.reshape(n, h_eff + 8, (w + 2) * c)
        wpc = (w + 2) * c
        fwc = 4 * w * c_out
        w_b = _fold_weights_banded(weight, w).astype(compute_dtype)
        b_b = jnp.tile(bias, 4 * w).reshape(1, fwc).astype(jnp.float32)

        out = pl.pallas_call(
            _banded_kernel,
            out_shape=jax.ShapeDtypeStruct((n, h_eff, fwc), x_nchw.dtype),
            grid_spec=pltpu.PrefetchScalarGridSpec(
                num_scalar_prefetch=0,
                grid=(n, num_strips),
                in_specs=[
                    # strip body: rows [s*TH, s*TH+TH)
                    pl.BlockSpec((1, th, wpc), lambda i, s: (i, s, 0)),
                    # 2-row halo, fetched as one aligned 8-row block (rows 0..1 used)
                    pl.BlockSpec((1, 8, wpc),
                                 lambda i, s: (i, (s + 1) * (th // 8), 0)),
                    # TODO(synk): at very large C, tile Cout on a 3rd grid axis and
                    # use pipeline_mode=pl.Buffered(1) so the resident weight tile
                    # stays bounded on v7x's 64 MiB VMEM.
                    pl.BlockSpec((3 * wpc, fwc), lambda i, s: (0, 0)),
                    pl.BlockSpec((1, fwc), lambda i, s: (0, 0)),
                ],
                out_specs=pl.BlockSpec((1, th, fwc), lambda i, s: (i, s, 0)),
            ),
            compiler_params=params,
        )(xp, xp, w_b, b_b)

        # (N, Heff, [a,j,b,co]) -> (N, Co, 2H, 2W): a single XLA transpose folds
        # the phase interleave with the NHWC->NCHW conversion; the slice drops
        # the h_eff padding rows.  A fused consumer could take the phase-major
        # layout directly and skip this extra HBM pass over the 4x-sized output.
        out = out.reshape(n, h_eff, 2, w, 2, c_out)[:, :h]
        out = jnp.transpose(out, (0, 5, 1, 2, 3, 4)).reshape(n, c_out, 2 * h, 2 * w)
        return out

    # ---- im2col fallback (large W*C): fused 9-tap matmul per strip -----------
    xp = jnp.pad(x_nhwc, ((0, 0), (1, h_eff - h + 1), (1, 1), (0, 0)))
    w_f = _fold_weights_im2col(weight).astype(compute_dtype)
    b_f = jnp.tile(bias, 4).reshape(1, 4 * c_out).astype(jnp.float32)
    twc = 2 * w * c_out

    out = pl.pallas_call(
        _im2col_kernel,
        out_shape=jax.ShapeDtypeStruct((n, 2, h_eff, twc), x_nchw.dtype),
        grid_spec=pltpu.PrefetchScalarGridSpec(
            num_scalar_prefetch=0,
            grid=(n, num_strips),
            in_specs=[
                pl.BlockSpec((1, th, w + 2, c), lambda i, s: (i, s, 0, 0)),
                # merged 2-row halo (TH is always a multiple of 8 -> block index exact)
                pl.BlockSpec((1, 2, w + 2, c),
                             lambda i, s: (i, (s + 1) * (th // 2), 0, 0)),
                pl.BlockSpec((9 * c, 4 * c_out), lambda i, s: (0, 0)),
                pl.BlockSpec((1, 4 * c_out), lambda i, s: (0, 0)),
            ],
            out_specs=pl.BlockSpec((1, 2, th, twc), lambda i, s: (i, 0, s, 0)),
        ),
        compiler_params=params,
    )(xp, xp, w_f, b_f)

    out = out.reshape(n, 2, h_eff, w, 2, c_out)[:, :, :h]
    out = jnp.transpose(out, (0, 5, 2, 1, 3, 4)).reshape(n, c_out, 2 * h, 2 * w)
    return out


# ---------------------------------------------------------------------------
# Reference + test
# ---------------------------------------------------------------------------
def _reference(x_nchw, weight, bias):
    """Pure-JAX reference: nearest upsample x2 + conv2d(3x3, pad=1)."""
    x_up = jnp.repeat(jnp.repeat(x_nchw, 2, axis=2), 2, axis=3)
    out = jax.lax.conv_general_dilated(
        x_up, weight,
        window_strides=(1, 1), padding=((1, 1), (1, 1)),
        dimension_numbers=("NCHW", "OIHW", "NCHW"))
    return out + bias.reshape(1, -1, 1, 1)


def _conv_init(kw, kb, c_out, c_in):
    fan_in = c_in * 3 * 3
    bound = 1.0 / (fan_in ** 0.5)
    weight = jax.random.uniform(kw, (c_out, c_in, 3, 3), jnp.float32, -bound, bound)
    bias = jax.random.uniform(kb, (c_out,), jnp.float32, -bound, bound)
    return weight, bias


if __name__ == "__main__":
    key = jax.random.PRNGKey(0)
    kx, kw, kb, kx2, kw2, kb2 = jax.random.split(key, 6)

    fwd = jax.jit(upsample_forward,
                  static_argnames=("compute_dtype", "force_path"))

    def _check(out, ref, tag, atol, rtol):
        assert out.shape == ref.shape, (tag, out.shape, ref.shape)
        err = float(jnp.max(jnp.abs(out - ref)))
        assert jnp.allclose(out, ref, atol=atol, rtol=rtol), (tag, err)

    # Primary shape: N=2, C=4, H=W=16.
    N, C, H, W = 2, 4, 16, 16
    x = jax.random.normal(kx, (N, C, H, W), dtype=jnp.float32)
    weight, bias = _conv_init(kw, kb, C, C)
    ref = jax.block_until_ready(_reference(x, weight, bias))

    # 1) default path (banded, f32 operands) — exact parity.
    out = jax.block_until_ready(fwd(x, weight, bias))
    _check(out, ref, "banded_f32", 1e-4, 1e-4)

    # 2) forced im2col fallback (the path used at production W*C).
    out = jax.block_until_ready(fwd(x, weight, bias, force_path="im2col"))
    _check(out, ref, "im2col_f32", 1e-4, 1e-4)

    # 3) bf16 MXU operands, f32 accumulation (looser tolerance).
    out = jax.block_until_ready(fwd(x, weight, bias, compute_dtype=jnp.bfloat16))
    _check(out, ref, "banded_bf16", 5e-2, 5e-2)

    # Secondary shape: odd channels, non-square, H not a multiple of 8, N=1
    # (exercises multi-strip halo indexing and the h_eff row padding/trim).
    N2, C2, H2, W2 = 1, 3, 12, 10
    x2 = jax.random.normal(kx2, (N2, C2, H2, W2), dtype=jnp.float32)
    weight2, bias2 = _conv_init(kw2, kb2, C2, C2)
    ref2 = jax.block_until_ready(_reference(x2, weight2, bias2))

    out2 = jax.block_until_ready(fwd(x2, weight2, bias2))
    _check(out2, ref2, "banded_f32_odd", 1e-4, 1e-4)
    out2 = jax.block_until_ready(fwd(x2, weight2, bias2, force_path="im2col"))
    _check(out2, ref2, "im2col_f32_odd", 1e-4, 1e-4)

    print("KERNEL_OK")
</pallas_src>

<mosaic_0001>
module attributes {stable_mosaic.version = 11 : i64} {
  func.func @_banded_kernel(%arg0: i32, %arg1: i32, %arg2: memref<1x16x72xf32, #tpu.memory_space<vmem>>, %arg3: memref<1x8x72xf32, #tpu.memory_space<vmem>>, %arg4: memref<216x256xf32, #tpu.memory_space<vmem>>, %arg5: memref<1x256xf32, #tpu.memory_space<vmem>>, %arg6: memref<1x16x256xf32, #tpu.memory_space<vmem>>) attributes {dimension_semantics = [#tpu.dimension_semantics<parallel>, #tpu.dimension_semantics<parallel>], iteration_bounds = array<i64: 2, 1>, scalar_prefetch = 0 : i64, scratch_operands = 0 : i64, tpu.core_type = #tpu.core_type<tc>, window_params = [{transform_indices = @transform_0, window_bounds = array<i64: 1, 16, 72>}, {transform_indices = @transform_1, window_bounds = array<i64: 1, 8, 72>}, {pipeline_mode = #tpu.pipeline_mode<synchronous>, transform_indices = @transform_2, window_bounds = array<i64: 216, 256>}, {pipeline_mode = #tpu.pipeline_mode<synchronous>, transform_indices = @transform_3, window_bounds = array<i64: 1, 256>}, {transform_indices = @transform_4, window_bounds = array<i64: 1, 16, 256>}]} {
    %c0 = arith.constant 0 : index
    %c0_0 = arith.constant 0 : index
    %c0_1 = arith.constant 0 : index
    %0 = vector.load %arg2[%c0, %c0_0, %c0_1] : memref<1x16x72xf32, #tpu.memory_space<vmem>>, vector<1x16x72xf32>
    %1 = vector.shape_cast %0 : vector<1x16x72xf32> to vector<16x72xf32>
    %c0_2 = arith.constant 0 : index
    %c0_3 = arith.constant 0 : index
    %c0_4 = arith.constant 0 : index
    %2 = vector.load %arg3[%c0_2, %c0_3, %c0_4] : memref<1x8x72xf32, #tpu.memory_space<vmem>>, vector<1x2x72xf32>
    %3 = vector.shape_cast %2 : vector<1x2x72xf32> to vector<2x72xf32>
    %4 = tpu.concatenate %1, %3 in 0 : vector<16x72xf32>, vector<2x72xf32> -> vector<18x72xf32>
    %5 = vector.extract_strided_slice %4 {offsets = [0, 0], sizes = [16, 72], strides = [1, 1]} : vector<18x72xf32> to vector<16x72xf32>
    %6 = vector.extract_strided_slice %4 {offsets = [1, 0], sizes = [16, 72], strides = [1, 1]} : vector<18x72xf32> to vector<16x72xf32>
    %7 = vector.extract_strided_slice %4 {offsets = [2, 0], sizes = [16, 72], strides = [1, 1]} : vector<18x72xf32> to vector<16x72xf32>
    %8 = tpu.concatenate %5, %6, %7 in 1 : vector<16x72xf32>, vector<16x72xf32>, vector<16x72xf32> -> vector<16x216xf32>
    %c0_5 = arith.constant 0 : index
    %c0_6 = arith.constant 0 : index
    %9 = vector.load %arg4[%c0_5, %c0_6] : memref<216x256xf32, #tpu.memory_space<vmem>>, vector<216x256xf32>
    %cst = arith.constant dense<0.000000e+00> : vector<16x256xf32>
    %10 = tpu.matmul %8, %9, %cst {dimension_numbers = #tpu.dot_dimension_numbers<[1], [0], [0], [1], [0, 0, 1, 1], [], []>} : vector<16x216xf32>, vector<216x256xf32>, vector<16x256xf32> -> vector<16x256xf32>
    %c0_7 = arith.constant 0 : index
    %c0_8 = arith.constant 0 : index
    %11 = vector.load %arg5[%c0_7, %c0_8] : memref<1x256xf32, #tpu.memory_space<vmem>>, vector<1x256xf32>
    %12 = vector.broadcast %11 : vector<1x256xf32> to vector<16x256xf32>
    %13 = arith.addf %10, %12 : vector<16x256xf32>
    %c0_9 = arith.constant 0 : index
    %c0_10 = arith.constant 0 : index
    %c0_11 = arith.constant 0 : index
    %14 = vector.load %arg6[%c0_9, %c0_10, %c0_11] : memref<1x16x256xf32, #tpu.memory_space<vmem>>, vector<1x16x256xf32>
    %15 = vector.shape_cast %14 : vector<1x16x256xf32> to vector<16x256xf32>
    %16 = vector.shape_cast %13 : vector<16x256xf32> to vector<1x16x256xf32>
    tpu.vector_store %arg6[%c0_9, %c0_10, %c0_11], %16 {strides = array<i32>} : memref<1x16x256xf32, #tpu.memory_space<vmem>>, vector<1x16x256xf32>,
    return
  }
  func.func @transform_0(%arg0: i32, %arg1: i32) -> (i32, i32, i32) {
    %c0_i32 = arith.constant 0 : i32
    %c0_i32_0 = arith.constant 0 : i32
    return %arg0, %arg1, %c0_i32 : i32, i32, i32
  }
  func.func @transform_1(%arg0: i32, %arg1: i32) -> (i32, i32, i32) {
    %c1_i32 = arith.constant 1 : i32
    %0 = arith.addi %arg1, %c1_i32 : i32
    %c2_i32 = arith.constant 2 : i32
    %1 = arith.muli %0, %c2_i32 : i32
    %c0_i32 = arith.constant 0 : i32
    %c0_i32_0 = arith.constant 0 : i32
    return %arg0, %1, %c0_i32 : i32, i32, i32
  }
  func.func @transform_2(%arg0: i32, %arg1: i32) -> (i32, i32) {
    %c0_i32 = arith.constant 0 : i32
    %c0_i32_0 = arith.constant 0 : i32
    %c0_i32_1 = arith.constant 0 : i32
    return %c0_i32, %c0_i32_0 : i32, i32
  }
  func.func @transform_3(%arg0: i32, %arg1: i32) -> (i32, i32) {
    %c0_i32 = arith.constant 0 : i32
    %c0_i32_0 = arith.constant 0 : i32
    %c0_i32_1 = arith.constant 0 : i32
    return %c0_i32, %c0_i32_0 : i32, i32
  }
  func.func @transform_4(%arg0: i32, %arg1: i32) -> (i32, i32, i32) {
    %c0_i32 = arith.constant 0 : i32
    %c0_i32_0 = arith.constant 0 : i32
    return %arg0, %arg1, %c0_i32 : i32, i32, i32
  }
}

</mosaic_0001>

<llo_original>
// kernel: tile.8
$region0: #{tile.8}
  #allocation0 [shape = 's32[1]{0}', space=sflag, size = 0x4, scoped, tag = 'scoped memory for tile.8']
  %s0 = inlined_call_operand.vmem [shape: f32[4], index: 0, kind: input, shape index: {}]
  %s1 = inlined_call_operand.vmem [shape: f32[64,4], index: 1, kind: output, shape index: {}]
  // Predicated region
  $region2: #{tile.8} parent=0 // pred_check
    _
  $region3: #{tile.8} parent=0 // pred_check_branch
    %3 = sbr.rel (0) target = $region5
  $region4: #{tile.8} parent=0 // pred_region
    _
  $region5: #{tile.8} parent=0 // pred_fallthru
    _
  %v4 = vld [vmem:[%s0] ss:$0 sm:$0xff]
  %5 = vst [vmem:[%s1] sm:$0xff] %v4
  %s6 = scalar_lea.vmem %s1, 8
  %7 = vst [vmem:[%s6] sm:$0xff] %v4
  %s8 = scalar_lea.vmem %s1, 16
  %9 = vst [vmem:[%s8] sm:$0xff] %v4
  %s10 = scalar_lea.vmem %s1, 24
  %11 = vst [vmem:[%s10] sm:$0xff] %v4
  %s12 = scalar_lea.vmem %s1, 32
  %13 = vst [vmem:[%s12] sm:$0xff] %v4
  %s14 = scalar_lea.vmem %s1, 40
  %15 = vst [vmem:[%s14] sm:$0xff] %v4
  %s16 = scalar_lea.vmem %s1, 48
  %17 = vst [vmem:[%s16] sm:$0xff] %v4
  %s18 = scalar_lea.vmem %s1, 56
  %19 = vst [vmem:[%s18] sm:$0xff] %v4

// kernel: tile.9
$region0: #{tile.9}
  %s0 = inlined_call_operand.vmem [shape: f32[64,4], index: 0, kind: input, shape index: {}]
  %s1 = inlined_call_operand.vmem [shape: f32[1,256], index: 1, kind: output, shape index: {}]
  $region1: #{tile.9} parent=0
    #allocation0 [shape = 'u8[8192]{0}', space=vmem, size = 0x2000, scoped, tag = 'scoped mem for output reshape']
    %v2 = vld [vmem:[%s0] sm:$0x1]
    %s3 = scalar_lea.vmem %s0, 31
    %v4 = vld [vmem:[%s3] sm:$0x2]
    %vm5 = vcmask 1041409
    %v6 = vsel %vm5, %v4, %v2
    %vm7 = vcmask 31744
    %8 = vst.msk [vmem:[#allocation0] ss:$8 sm:$0x3] %vm7, %v6
    %s9 = scalar_lea.vmem %s0, 31
    %v10 = vld [vmem:[%s9] sm:$0x1]
    %s11 = scalar_lea.vmem %s0, 62
    %v12 = vld [vmem:[%s11] sm:$0x2]
    %vm13 = vcmask 1041409
    %v14 = vsel %vm13, %v12, %v10
    %15 = vrot.lane.b32.xlu0 %v14, 124
    %v16 = vpop.permute.xlu0 %15
    %vm17 = vcmask 1048544
    %18 = vst.msk [vmem:[#allocation0] ss:$8 sm:$0x3] %vm17, %v16
    %s19 = scalar_lea.vmem %s0, 30
    %v20 = vld [vmem:[%s19] sm:$0x1]
    %s21 = scalar_lea.vmem %s0, 61
    %v22 = vld [vmem:[%s21] sm:$0x2]
    %vm23 = vcmask 1041409
    %v24 = vsel %vm23, %v22, %v20
    %25 = vrot.lane.b32.xlu0 %v24, 120
    %v26 = vpop.permute.xlu0 %25
    %vm27 = vcmask 1015744
    %28 = vst.msk [vmem:[#allocation0] ss:$8 sm:$0x3] %vm27, %v26
    %s29 = scalar_lea.vmem %s0, 29
    %v30 = vld [vmem:[%s29] sm:$0x1]
    %s31 = scalar_lea.vmem %s0, 60
    %v32 = vld [vmem:[%s31] sm:$0x2]
    %vm33 = vcmask 1041409
    %v34 = vsel %vm33, %v32, %v30
    %35 = vrot.lane.b32.xlu0 %v34, 116
    %v36 = vpop.permute.xlu0 %35
    %vm37 = vcmask 982944
    %38 = vst.msk [vmem:[#allocation0] ss:$8 sm:$0x3] %vm37, %v36
    %s39 = scalar_lea.vmem %s0, 28
    %v40 = vld [vmem:[%s39] sm:$0x1]
    %s41 = scalar_lea.vmem %s0, 59
    %v42 = vld [vmem:[%s41] sm:$0x2]
    %vm43 = vcmask 1041409
    %v44 = vsel %vm43, %v42, %v40
    %45 = vrot.lane.b32.xlu0 %v44, 112
    %v46 = vpop.permute.xlu0 %45
    %vm47 = vcmask 950144
    %48 = vst.msk [vmem:[#allocation0] ss:$8 sm:$0x3] %vm47, %v46
    %s49 = scalar_lea.vmem %s0, 27
    %v50 = vld [vmem:[%s49] sm:$0x1]
    %s51 = scalar_lea.vmem %s0, 58
    %v52 = vld [vmem:[%s51] sm:$0x2]
    %vm53 = vcmask 1041409
    %v54 = vsel %vm53, %v52, %v50
    %55 = vrot.lane.b32.xlu0 %v54, 108
    %v56 = vpop.permute.xlu0 %55
    %vm57 = vcmask 917344
    %58 = vst.msk [vmem:[#allocation0] ss:$8 sm:$0x3] %vm57, %v56
    %s59 = scalar_lea.vmem %s0, 26
    %v60 = vld [vmem:[%s59] sm:$0x1]
    %s61 = scalar_lea.vmem %s0, 57
    %v62 = vld [vmem:[%s61] sm:$0x2]
    %vm63 = vcmask 1041409
    %v64 = vsel %vm63, %v62, %v60
    %65 = vrot.lane.b32.xlu0 %v64, 104
    %v66 = vpop.permute.xlu0 %65
    %vm67 = vcmask 884544
    %68 = vst.msk [vmem:[#allocation0] ss:$8 sm:$0x3] %vm67, %v66
    %s69 = scalar_lea.vmem %s0, 25
    %v70 = vld [vmem:[%s69] sm:$0x1]
    %s71 = scalar_lea.vmem %s0, 56
    %v72 = vld [vmem:[%s71] sm:$0x2]
    %vm73 = vcmask 1041409
    %v74 = vsel %vm73, %v72, %v70
    %75 = vrot.lane.b32.xlu0 %v74, 100
    %v76 = vpop.permute.xlu0 %75
    %vm77 = vcmask 851744
    %78 = vst.msk [vmem:[#allocation0] ss:$8 sm:$0x3] %vm77, %v76
    %s79 = scalar_lea.vmem %s0, 24
    %v80 = vld [vmem:[%s79] sm:$0x1]
    %s81 = scalar_lea.vmem %s0, 55
    %v82 = vld [vmem:[%s81] sm:$0x2]
    %vm83 = vcmask 1041409
    %v84 = vsel %vm83, %v82, %v80
    %85 = vrot.lane.b32.xlu0 %v84, 96
    %v86 = vpop.permute.xlu0 %85
    %vm87 = vcmask 818944
    %88 = vst.msk [vmem:[#allocation0] ss:$8 sm:$0x3] %vm87, %v86
    %s89 = scalar_lea.vmem %s0, 23
    %v90 = vld [vmem:[%s89] sm:$0x1]
    %s91 = scalar_lea.vmem %s0, 54
    %v92 = vld [vmem:[%s91] sm:$0x2]
    %vm93 = vcmask 1041409
    %v94 = vsel %vm93, %v92, %v90
    %95 = vrot.lane.b32.xlu0 %v94, 92
    %v96 = vpop.permute.xlu0 %95
    %vm97 = vcmask 786144
    %98 = vst.msk [vmem:[#allocation0] ss:$8 sm:$0x3] %vm97, %v96
    %s99 = scalar_lea.vmem %s0, 22
    %v100 = vld [vmem:[%s99] sm:$0x1]
    %s101 = scalar_lea.vmem %s0, 53
    %v102 = vld [vmem:[%s101] sm:$0x2]
    %vm103 = vcmask 1041409
    %v104 = vsel %vm103, %v102, %v100
    %105 = vrot.lane.b32.xlu0 %v104, 88
    %v106 = vpop.permute.xlu0 %105
    %vm107 = vcmask 753344
    %108 = vst.msk [vmem:[#allocation0] ss:$8 sm:$0x3] %vm107, %v106
    %s109 = scalar_lea.vmem %s0, 21
    %v110 = vld [vmem:[%s109] sm:$0x1]
    %s111 = scalar_lea.vmem %s0, 52
    %v112 = vld [vmem:[%s111] sm:$0x2]
    %vm113 = vcmask 1041409
    %v114 = vsel %vm113, %v112, %v110
    %115 = vrot.lane.b32.xlu0 %v114, 84
    %v116 = vpop.permute.xlu0 %115
    %vm117 = vcmask 720544
    %118 = vst.msk [vmem:[#allocation0] ss:$8 sm:$0x3] %vm117, %v116
    %s119 = scalar_lea.vmem %s0, 20
    %v120 = vld [vmem:[%s119] sm:$0x1]
    %s121 = scalar_lea.vmem %s0, 51
    %v122 = vld [vmem:[%s121] sm:$0x2]
    %vm123 = vcmask 1041409
    %v124 = vsel %vm123, %v122, %v120
    %125 = vrot.lane.b32.xlu0 %v124, 80
    %v126 = vpop.permute.xlu0 %125
    %vm127 = vcmask 687744
    %128 = vst.msk [vmem:[#allocation0] ss:$8 sm:$0x3] %vm127, %v126
    %s129 = scalar_lea.vmem %s0, 19
    %v130 = vld [vmem:[%s129] sm:$0x1]
    %s131 = scalar_lea.vmem %s0, 50
    %v132 = vld [vmem:[%s131] sm:$0x2]
    %vm133 = vcmask 1041409
    %v134 = vsel %vm133, %v132, %v130
    %135 = vrot.lane.b32.xlu0 %v134, 76
    %v136 = vpop.permute.xlu0 %135
    %vm137 = vcmask 654944
    %138 = vst.msk [vmem:[#allocation0] ss:$8 sm:$0x3] %vm137, %v136
    %s139 = scalar_lea.vmem %s0, 18
    %v140 = vld [vmem:[%s139] sm:$0x1]
    %s141 = scalar_lea.vmem %s0, 49
    %v142 = vld [vmem:[%s141] sm:$0x2]
    %vm143 = vcmask 1041409
    %v144 = vsel %vm143, %v142, %v140
    %145 = vrot.lane.b32.xlu0 %v144, 72
    %v146 = vpop.permute.xlu0 %145
    %vm147 = vcmask 622144
    %148 = vst.msk [vmem:[#allocation0] ss:$8 sm:$0x3] %vm147, %v146
    %s149 = scalar_lea.vmem %s0, 17
    %v150 = vld [vmem:[%s149] sm:$0x1]
    %s151 = scalar_lea.vmem %s0, 48
    %v152 = vld [vmem:[%s151] sm:$0x2]
    %vm153 = vcmask 1041409
    %v154 = vsel %vm153, %v152, %v150
    %155 = vrot.lane.b32.xlu0 %v154, 68
    %v156 = vpop.permute.xlu0 %155
    %vm157 = vcmask 589344
    %158 = vst.msk [vmem:[#allocation0] ss:$8 sm:$0x3] %vm157, %v156
    %s159 = scalar_lea.vmem %s0, 16
    %v160 = vld [vmem:[%s159] sm:$0x1]
    %s161 = scalar_lea.vmem %s0, 47
    %v162 = vld [vmem:[%s161] sm:$0x2]
    %vm163 = vcmask 1041409
    %v164 = vsel %vm163, %v162, %v160
    %165 = vrot.lane.b32.xlu0 %v164, 64
    %v166 = vpop.permute.xlu0 %165
    %vm167 = vcmask 556544
    %168 = vst.msk [vmem:[#allocation0] ss:$8 sm:$0x3] %vm167, %v166
    %s169 = scalar_lea.vmem %s0, 15
    %v170 = vld [vmem:[%s169] sm:$0x1]
    %s171 = scalar_lea.vmem %s0, 46
    %v172 = vld [vmem:[%s171] sm:$0x2]
    %vm173 = vcmask 1041409
    %v174 = vsel %vm173, %v172, %v170
    %175 = vrot.lane.b32.xlu0 %v174, 60
    %v176 = vpop.permute.xlu0 %175
    %vm177 = vcmask 523744
    %178 = vst.msk [vmem:[#allocation0] ss:$8 sm:$0x3] %vm177, %v176
    %s179 = scalar_lea.vmem %s0, 14
    %v180 = vld [vmem:[%s179] sm:$0x1]
    %s181 = scalar_lea.vmem %s0, 45
    %v182 = vld [vmem:[%s181] sm:$0x2]
    %vm183 = vcmask 1041409
    %v184 = vsel %vm183, %v182, %v180
    %185 = vrot.lane.b32.xlu0 %v184, 56
    %v186 = vpop.permute.xlu0 %185
    %vm187 = vcmask 490944
    %188 = vst.msk [vmem:[#allocation0] ss:$8 sm:$0x3] %vm187, %v186
    %s189 = scalar_lea.vmem %s0, 13
    %v190 = vld [vmem:[%s189] sm:$0x1]
    %s191 = scalar_lea.vmem %s0, 44
    %v192 = vld [vmem:[%s191] sm:$0x2]
    %vm193 = vcmask 1041409
    %v194 = vsel %vm193, %v192, %v190
    %195 = vrot.lane.b32.xlu0 %v194, 52
    %v196 = vpop.permute.xlu0 %195
    %vm197 = vcmask 458144
    %198 = vst.msk [vmem:[#allocation0] ss:$8 sm:$0x3] %vm197, %v196
    %s199 = scalar_lea.vmem %s0, 12
    %v200 = vld [vmem:[%s199] sm:$0x1]
    %s201 = scalar_lea.vmem %s0, 43
    %v202 = vld [vmem:[%s201] sm:$0x2]
    %vm203 = vcmask 1041409
    %v204 = vsel %vm203, %v202, %v200
    %205 = vrot.lane.b32.xlu0 %v204, 48
    %v206 = vpop.permute.xlu0 %205
    %vm207 = vcmask 425344
    %208 = vst.msk [vmem:[#allocation0] ss:$8 sm:$0x3] %vm207, %v206
    %s209 = scalar_lea.vmem %s0, 11
    %v210 = vld [vmem:[%s209] sm:$0x1]
    %s211 = scalar_lea.vmem %s0, 42
    %v212 = vld [vmem:[%s211] sm:$0x2]
    %vm213 = vcmask 1041409
    %v214 = vsel %vm213, %v212, %v210
    %215 = vrot.lane.b32.xlu0 %v214, 44
    %v216 = vpop.permute.xlu0 %215
    %vm217 = vcmask 392544
    %218 = vst.msk [vmem:[#allocation0] ss:$8 sm:$0x3] %vm217, %v216
    %s219 = scalar_lea.vmem %s0, 10
    %v220 = vld [vmem:[%s219] sm:$0x1]
    %s221 = scalar_lea.vmem %s0, 41
    %v222 = vld [vmem:[%s221] sm:$0x2]
    %vm223 = vcmask 1041409
    %v224 = vsel %vm223, %v222, %v220
    %225 = vrot.lane.b32.xlu0 %v224, 40
    %v226 = vpop.permute.xlu0 %225
    %vm227 = vcmask 359744
    %228 = vst.msk [vmem:[#allocation0] ss:$8 sm:$0x3] %vm227, %v226
    %s229 = scalar_lea.vmem %s0, 9
    %v230 = vld [vmem:[%s229] sm:$0x1]
    %s231 = scalar_lea.vmem %s0, 40
    %v232 = vld [vmem:[%s231] sm:$0x2]
    %vm233 = vcmask 1041409
    %v234 = vsel %vm233, %v232, %v230
    %235 = vrot.lane.b32.xlu0 %v234, 36
    %v236 = vpop.permute.xlu0 %235
    %vm237 = vcmask 326944
    %238 = vst.msk [vmem:[#allocation0] ss:$8 sm:$0x3] %vm237, %v236
    %s239 = scalar_lea.vmem %s0, 8
    %v240 = vld [vmem:[%s239] sm:$0x1]
    %s241 = scalar_lea.vmem %s0, 39
    %v242 = vld [vmem:[%s241] sm:$0x2]
    %vm243 = vcmask 1041409
    %v244 = vsel %vm243, %v242, %v240
    %245 = vrot.lane.b32.xlu0 %v244, 32
    %v246 = vpop.permute.xlu0 %245
    %vm247 = vcmask 294144
    %248 = vst.msk [vmem:[#allocation0] ss:$8 sm:$0x3] %vm247, %v246
    %s249 = scalar_lea.vmem %s0, 7
    %v250 = vld [vmem:[%s249] sm:$0x1]
    %s251 = scalar_lea.vmem %s0, 38
    %v252 = vld [vmem:[%s251] sm:$0x2]
    %vm253 = vcmask 1041409
    %v254 = vsel %vm253, %v252, %v250
    %255 = vrot.lane.b32.xlu0 %v254, 28
    %v256 = vpop.permute.xlu0 %255
    %vm257 = vcmask 261344
    %258 = vst.msk [vmem:[#allocation0] ss:$8 sm:$0x3] %vm257, %v256
    %s259 = scalar_lea.vmem %s0, 6
    %v260 = vld [vmem:[%s259] sm:$0x1]
    %s261 = scalar_lea.vmem %s0, 37
    %v262 = vld [vmem:[%s261] sm:$0x2]
    %vm263 = vcmask 1041409
    %v264 = vsel %vm263, %v262, %v260
    %265 = vrot.lane.b32.xlu0 %v264, 24
    %v266 = vpop.permute.xlu0 %265
    %vm267 = vcmask 228544
    %268 = vst.msk [vmem:[#allocation0] ss:$8 sm:$0x3] %vm267, %v266
    %s269 = scalar_lea.vmem %s0, 5
    %v270 = vld [vmem:[%s269] sm:$0x1]
    %s271 = scalar_lea.vmem %s0, 36
    %v272 = vld [vmem:[%s271] sm:$0x2]
    %vm273 = vcmask 1041409
    %v274 = vsel %vm273, %v272, %v270
    %275 = vrot.lane.b32.xlu0 %v274, 20
    %v276 = vpop.permute.xlu0 %275
    %vm277 = vcmask 195744
    %278 = vst.msk [vmem:[#allocation0] ss:$8 sm:$0x3] %vm277, %v276
    %s279 = scalar_lea.vmem %s0, 4
    %v280 = vld [vmem:[%s279] sm:$0x1]
    %s281 = scalar_lea.vmem %s0, 35
    %v282 = vld [vmem:[%s281] sm:$0x2]
    %vm283 = vcmask 1041409
    %v284 = vsel %vm283, %v282, %v280
    %285 = vrot.lane.b32.xlu0 %v284, 16
    %v286 = vpop.permute.xlu0 %285
    %vm287 = vcmask 162944
    %288 = vst.msk [vmem:[#allocation0] ss:$8 sm:$0x3] %vm287, %v286
    %s289 = scalar_lea.vmem %s0, 3
    %v290 = vld [vmem:[%s289] sm:$0x1]
    %s291 = scalar_lea.vmem %s0, 34
    %v292 = vld [vmem:[%s291] sm:$0x2]
    %vm293 = vcmask 1041409
    %v294 = vsel %vm293, %v292, %v290
    %295 = vrot.lane.b32.xlu0 %v294, 12
    %v296 = vpop.permute.xlu0 %295
    %vm297 = vcmask 130144
    %298 = vst.msk [vmem:[#allocation0] ss:$8 sm:$0x3] %vm297, %v296
    %s299 = scalar_lea.vmem %s0, 2
    %v300 = vld [vmem:[%s299] sm:$0x1]
    %s301 = scalar_lea.vmem %s0, 33
    %v302 = vld [vmem:[%s301] sm:$0x2]
    %vm303 = vcmask 1041409
    %v304 = vsel %vm303, %v302, %v300
    %305 = vrot.lane.b32.xlu0 %v304, 8
    %v306 = vpop.permute.xlu0 %305
    %vm307 = vcmask 97344
    %308 = vst.msk [vmem:[#allocation0] ss:$8 sm:$0x3] %vm307, %v306
    %s309 = scalar_lea.vmem %s0, 1
    %v310 = vld [vmem:[%s309] sm:$0x1]
    %s311 = scalar_lea.vmem %s0, 32
    %v312 = vld [vmem:[%s311] sm:$0x2]
    %vm313 = vcmask 1041409
    %v314 = vsel %vm313, %v312, %v310
    %315 = vrot.lane.b32.xlu0 %v314, 4
    %v316 = vpop.permute.xlu0 %315
    %vm317 = vcmask 64544
    %318 = vst.msk [vmem:[#allocation0] ss:$8 sm:$0x3] %vm317, %v316
    %s320 = sshll.u32 1, 1
    %s321 = ssub.s32 %s320, 1
    %v323 = vld [vmem:[#allocation0] sm:%s321]
    %s324 = sshll.u32 1, 1
    %s325 = ssub.s32 %s324, 1
    %326 = vst [vmem:[%s1] sm:%s325] %v323
    %s327 = scalar_lea.vmem [#allocation0], 8
    %v328 = vld [vmem:[%s327] sm:%s321]
    %s329 = sshll.u32 1, 1
    %s330 = ssub.s32 %s329, 1
    %s331 = scalar_lea.vmem %s1, 1
    %332 = vst [vmem:[%s331] sm:%s330] %v328

// kernel: upsample_forward.1
$region0: #{upsample_forward.1}
  #allocation0 [shape = 'u32[]', space=smem, size = 0x4, offset = 0x4, fixed_abs, tag = 'smem constant byte address 0x4 - core index']
  #allocation1 [shape = 'u32[144,128]{1,0:T(1,128)}', space=vmem, size = 0x12000, scoped, tag = 'internal scratch']
  %s0 = inlined_call_operand.vmem [shape: f32[2,24,72], index: 0, kind: input, shape index: {}, may-alias: {0,1}]
  %s1 = inlined_call_operand.vmem [shape: f32[2,24,72], index: 1, kind: input, shape index: {}, may-alias: {0,1}]
  %s2 = inlined_call_operand.vmem [shape: f32[216,256], index: 2, kind: input, shape index: {}]
  %s3 = inlined_call_operand.vmem [shape: f32[1,256], index: 3, kind: input, shape index: {}]
  %s4 = inlined_call_operand.vmem [shape: f32[2,16,256], index: 4, kind: output, shape index: {}]
  %s5 = sld [smem:[#allocation0]]
  $region49: #{upsample_forward.1} parent=0
    _
  %s7 = ssub.s32 1, %s5
  %s8 = scalar_select 0, %s7, %s5
  loop: start=0, step=1, limit=4
  $region2: #{upsample_forward.1} parent=0 // loop_pre_header
    _
  $region3: #{upsample_forward.1} parent=0 // loop_header
    %s10 = sphi 0, %s14
    %p11 = scmp.ge.s32.totalorder %s10, 4
    %s17 = sphi 0, %s29
    %s18 = sphi 0, %s25
    %s19 = sphi 0, %s17
    %s20 = sphi 0, %s18
    %s21 = sphi 0, %s19
    %s22 = sphi 0, %s20
    %s34 = sphi 0, %s36
    %s37 = sphi 0, %s34
    %s38 = sphi 0, %s37
    %s54 = sphi 0, %s38
    %s66 = sphi 0, %s68
    %s69 = sphi 0, %s66
    %s70 = sphi 0, %s69
    %s86 = sphi 0, %s70
    %s90 = sphi 0, %s90
    %s92 = sphi 0, %s90
    %s93 = sphi 0, %s92
    %s107 = sphi 0, %s93
    %s111 = sphi 0, %s111
    %s113 = sphi 0, %s111
    %s114 = sphi 0, %s113
    %s128 = sphi 0, %s114
    %s136 = sphi 0, %s138
    %s139 = sphi 0, %s136
    %s140 = sphi 0, %s139
    %s156 = sphi 0, %s140
  $region4: #{upsample_forward.1} parent=0 // loop_header_branch
    %13 = sbr.rel (%p11) target = $region8
  $region5: #{upsample_forward.1} parent=0 // loop_body
    %s15 = ssub.s32 %s10, 1
    %s16 = ssub.s32 %s10, 2
    %s23 = sadd.s32 1, %s18
    %p24 = scmp.ge.s32.totalorder %s23, 1
    %s25 = scalar_select %p24, 0, %s23
    %s26 = sadd.s32 1, %s17
    %s27 = scalar_select %p24, %s26, %s17
    %p28 = scmp.ge.s32.totalorder %s27, 2
    %s29 = scalar_select %p28, 0, %s27
    %s30 = ssub.s32 %s17, %s29
    %s31 = ssub.s32 %s18, %s25
    %s32 = sor.u32 %s30, %s31
    %p33 = scmp.eq.s32.totalorder %s32, 0
    %s35 = sadd.s32 %s34, 1
    %s36 = scalar_select %p33, %s34, %s35
    %p39 = pneg %p33
    %p40 = scmp.eq.s32.totalorder %s10, 1
    %p41 = por %p39, %p40
    %p42 = scmp.ne.s32.totalorder %s34, %s37
    %p43 = scmp.eq.s32.totalorder %s10, 0
    %p44 = por %p42, %p43
    %p45 = scmp.ne.s32.totalorder %s34, %s37
    %p46 = scmp.eq.s32.totalorder %s15, 1
    %p47 = por %p45, %p46
    %p48 = scmp.ne.s32.totalorder %s37, %s38
    %p49 = scmp.eq.s32.totalorder %s15, 0
    %p50 = por %p48, %p49
    %p51 = scmp.ne.s32.totalorder %s37, %s38
    %p52 = scmp.eq.s32.totalorder %s16, 1
    %p53 = por %p51, %p52
    %p55 = scmp.ne.s32.totalorder %s38, %s54
    %p56 = scmp.eq.s32.totalorder %s16, 0
    %p57 = por %p55, %p56
    %s58 = sadd.s32 %s18, 1
    %s59 = smul.u32 %s58, 2
    %s60 = sadd.s32 %s25, 1
    %s61 = smul.u32 %s60, 2
    %s62 = ssub.s32 %s17, %s29
    %s63 = ssub.s32 %s59, %s61
    %s64 = sor.u32 %s62, %s63
    %p65 = scmp.eq.s32.totalorder %s64, 0
    %s67 = sadd.s32 %s66, 1
    %s68 = scalar_select %p65, %s66, %s67
    %p71 = pneg %p65
    %p72 = scmp.eq.s32.totalorder %s10, 1
    %p73 = por %p71, %p72
    %p74 = scmp.ne.s32.totalorder %s66, %s69
    %p75 = scmp.eq.s32.totalorder %s10, 0
    %p76 = por %p74, %p75
    %p77 = scmp.ne.s32.totalorder %s66, %s69
    %p78 = scmp.eq.s32.totalorder %s15, 1
    %p79 = por %p77, %p78
    %p80 = scmp.ne.s32.totalorder %s69, %s70
    %p81 = scmp.eq.s32.totalorder %s15, 0
    %p82 = por %p80, %p81
    %p83 = scmp.ne.s32.totalorder %s69, %s70
    %p84 = scmp.eq.s32.totalorder %s16, 1
    %p85 = por %p83, %p84
    %p87 = scmp.ne.s32.totalorder %s70, %s86
    %p88 = scmp.eq.s32.totalorder %s16, 0
    %p89 = por %p87, %p88
    %s91 = sadd.s32 %s90, 1
    %p94 = scmp.eq.s32.totalorder %s10, 1
    %p95 = scmp.ne.s32.totalorder %s90, %s92
    %p96 = scmp.eq.s32.totalorder %s10, 0
    %p97 = por %p95, %p96
    %p98 = scmp.ne.s32.totalorder %s90, %s92
    %p99 = scmp.eq.s32.totalorder %s15, 1
    %p100 = por %p98, %p99
    %p101 = scmp.ne.s32.totalorder %s92, %s93
    %p102 = scmp.eq.s32.totalorder %s15, 0
    %p103 = por %p101, %p102
    %p104 = scmp.ne.s32.totalorder %s92, %s93
    %p105 = scmp.eq.s32.totalorder %s16, 1
    %p106 = por %p104, %p105
    %p108 = scmp.ne.s32.totalorder %s93, %s107
    %p109 = scmp.eq.s32.totalorder %s16, 0
    %p110 = por %p108, %p109
    %s112 = sadd.s32 %s111, 1
    %p115 = scmp.eq.s32.totalorder %s10, 1
    %p116 = scmp.ne.s32.totalorder %s111, %s113
    %p117 = scmp.eq.s32.totalorder %s10, 0
    %p118 = por %p116, %p117
    %p119 = scmp.ne.s32.totalorder %s111, %s113
    %p120 = scmp.eq.s32.totalorder %s15, 1
    %p121 = por %p119, %p120
    %p122 = scmp.ne.s32.totalorder %s113, %s114
    %p123 = scmp.eq.s32.totalorder %s15, 0
    %p124 = por %p122, %p123
    %p125 = scmp.ne.s32.totalorder %s113, %s114
    %p126 = scmp.eq.s32.totalorder %s16, 1
    %p127 = por %p125, %p126
    %p129 = scmp.ne.s32.totalorder %s114, %s128
    %p130 = scmp.eq.s32.totalorder %s16, 0
    %p131 = por %p129, %p130
    %s132 = ssub.s32 %s17, %s29
    %s133 = ssub.s32 %s18, %s25
    %s134 = sor.u32 %s132, %s133
    %p135 = scmp.eq.s32.totalorder %s134, 0
    %s137 = sadd.s32 %s136, 1
    %s138 = scalar_select %p135, %s136, %s137
    %p141 = pneg %p135
    %p142 = scmp.eq.s32.totalorder %s10, 1
    %p143 = por %p141, %p142
    %p144 = scmp.ne.s32.totalorder %s136, %s139
    %p145 = scmp.eq.s32.totalorder %s10, 0
    %p146 = por %p144, %p145
    %p147 = scmp.ne.s32.totalorder %s136, %s139
    %p148 = scmp.eq.s32.totalorder %s15, 1
    %p149 = por %p147, %p148
    %p150 = scmp.ne.s32.totalorder %s139, %s140
    %p151 = scmp.eq.s32.totalorder %s15, 0
    %p152 = por %p150, %p151
    %p153 = scmp.ne.s32.totalorder %s139, %s140
    %p154 = scmp.eq.s32.totalorder %s16, 1
    %p155 = por %p153, %p154
    %p157 = scmp.ne.s32.totalorder %s140, %s156
    %p158 = scmp.eq.s32.totalorder %s16, 0
    %p159 = por %p157, %p158
    %p160 = scmp.le.s32.totalorder 1, %s10
    %p161 = scmp.lt.s32.totalorder %s10, 3
    %p162 = pnand %p160, %p161
    %p163 = pneg %p162
    // Predicated region
    $region9: #{upsample_forward.1} parent=5 // pred_check
      _
    $region10: #{upsample_forward.1} parent=5 // pred_check_branch
      %165 = sbr.rel (%p162) target = $region12
    $region11: #{upsample_forward.1} parent=5 // pred_region
      %s166 = ssub.s32 %s10, 1
      // Predicated region
      $region13: #{upsample_forward.1} parent=11 // pred_check
        %p167 = pneg %p103
      $region14: #{upsample_forward.1} parent=11 // pred_check_branch
        %169 = sbr.rel (%p167) target = $region16
      $region15: #{upsample_forward.1} parent=11 // pred_region
        _
      $region16: #{upsample_forward.1} parent=11 // pred_fallthru
        _
      // Predicated region
      $region17: #{upsample_forward.1} parent=11 // pred_check
        %p170 = pneg %p124
      $region18: #{upsample_forward.1} parent=11 // pred_check_branch
        %172 = sbr.rel (%p170) target = $region20
      $region19: #{upsample_forward.1} parent=11 // pred_region
        _
      $region20: #{upsample_forward.1} parent=11 // pred_fallthru
        _
    $region12: #{upsample_forward.1} parent=5 // pred_fallthru
      _
    %p173 = scmp.lt.s32.totalorder %s10, 2
    // Predicated region
    $region21: #{upsample_forward.1} parent=5 // pred_check
      %p174 = pneg %p173
    $region22: #{upsample_forward.1} parent=5 // pred_check_branch
      %176 = sbr.rel (%p174) target = $region24
    $region23: #{upsample_forward.1} parent=5 // pred_region
      // Predicated region
      $region25: #{upsample_forward.1} parent=23 // pred_check
        %p177 = pneg %p44
      $region26: #{upsample_forward.1} parent=23 // pred_check_branch
        %179 = sbr.rel (%p177) target = $region28
      $region27: #{upsample_forward.1} parent=23 // pred_region
        %s180 = smul.u32 2, %s18
        %s181 = ssub.s32 3, %s180
        %p182 = scmp.lt.s32.totalorder %s181, 2
        %s183 = scalar_select %p182, %s181, 2
        %s184 = smul.u32 128, %s183
        %p185 = scmp.lt.s32.totalorder %s17, 1
        %s186 = scalar_select %p185, %s17, 1
        %p187 = scmp.lt.s32.totalorder %s180, 2
        %s188 = scalar_select %p187, %s180, 2
        %s189 = smul.addr %s186, 3
        %s190 = sadd.s32 %s188, %s189
        %s191 = smul.addr %s190, 8
        %s192 = scalar_lea.vmem %s0, %s191
        %s193 = smul.u32 2, %s18
        %s194 = ssub.s32 3, %s193
        %p195 = scmp.lt.s32.totalorder %s194, 2
        %s196 = scalar_select %p195, %s194, 2
        %s197 = smul.u32 128, %s196
      $region28: #{upsample_forward.1} parent=23 // pred_fallthru
        _
      // Predicated region
      $region29: #{upsample_forward.1} parent=23 // pred_check
        %p198 = pneg %p76
      $region30: #{upsample_forward.1} parent=23 // pred_check_branch
        %200 = sbr.rel (%p198) target = $region32
      $region31: #{upsample_forward.1} parent=23 // pred_region
        %s201 = sadd.s32 %s18, 1
        %s202 = smul.u32 %s201, 2
        %p203 = scmp.lt.s32.totalorder %s17, 1
        %s204 = scalar_select %p203, %s17, 1
        %p205 = scmp.lt.s32.totalorder %s202, 2
        %s206 = scalar_select %p205, %s202, 2
        %s207 = smul.addr %s204, 3
        %s208 = sadd.s32 %s206, %s207
        %s209 = smul.addr %s208, 8
        %s210 = scalar_lea.vmem %s1, %s209
        %s211 = sadd.s32 %s18, 1
        %s212 = smul.u32 %s211, 2
      $region32: #{upsample_forward.1} parent=23 // pred_fallthru
        _
    $region24: #{upsample_forward.1} parent=5 // pred_fallthru
      _
    %p213 = scmp.le.s32.totalorder 1, %s10
    %p214 = scmp.lt.s32.totalorder %s10, 3
    %p215 = pnand %p213, %p214
    %p216 = pneg %p215
    // Predicated region
    $region33: #{upsample_forward.1} parent=5 // pred_check
      _
    $region34: #{upsample_forward.1} parent=5 // pred_check_branch
      %218 = sbr.rel (%p215) target = $region36
    $region35: #{upsample_forward.1} parent=5 // pred_region
      %s219 = ssub.s32 %s10, 1
      %s220 = smul.u32 2, %s20
      %s221 = ssub.s32 3, %s220
      %p222 = scmp.lt.s32.totalorder %s221, 2
      %s223 = scalar_select %p222, %s221, 2
      %s224 = smul.u32 128, %s223
      %p225 = scmp.lt.s32.totalorder %s19, 1
      %s226 = scalar_select %p225, %s19, 1
      %p227 = scmp.lt.s32.totalorder %s220, 2
      %s228 = scalar_select %p227, %s220, 2
      %s229 = smul.addr %s226, 3
      %s230 = sadd.s32 %s228, %s229
      %s231 = smul.addr %s230, 8
      %s232 = scalar_lea.vmem %s0, %s231
      %p233 = pneg %p50
      %p234 = pneg %p47
      %s235 = sadd.s32 %s20, 1
      %s236 = smul.u32 %s235, 2
      %p237 = scmp.lt.s32.totalorder %s19, 1
      %s238 = scalar_select %p237, %s19, 1
      %p239 = scmp.lt.s32.totalorder %s236, 2
      %s240 = scalar_select %p239, %s236, 2
      %s241 = smul.addr %s238, 3
      %s242 = sadd.s32 %s240, %s241
      %s243 = smul.addr %s242, 8
      %s244 = scalar_lea.vmem %s1, %s243
      %p245 = pneg %p82
      %p246 = pneg %p79
      %p247 = pneg %p103
      %p248 = pneg %p100
      %p249 = pneg %p124
      %p250 = pneg %p121
      %p251 = pneg %p152
      %p252 = pneg %p149
      %s253 = smul.u32 2, %s20
      %p254 = scmp.lt.s32.totalorder %s19, 1
      %s255 = scalar_select %p254, %s19, 1
      %p256 = scmp.lt.s32.totalorder %s253, 1
      %s257 = scalar_select %p256, %s253, 1
      %s258 = smul.addr %s257, 2
      %s259 = smul.addr %s255, 4
      %s260 = sadd.s32 %s258, %s259
      %s261 = smul.addr %s260, 8
      %s262 = scalar_lea.vmem %s4, %s261
      %s263 = smul.u32 2, %s20
      %s264 = ssub.s32 3, %s263
      %p265 = scmp.lt.s32.totalorder %s264, 2
      %s266 = scalar_select %p265, %s264, 2
      %s267 = smul.u32 128, %s266
      %p268 = scmp.lt.s32.totalorder %s19, 1
      %s269 = scalar_select %p268, %s19, 1
      %p270 = scmp.lt.s32.totalorder %s263, 2
      %s271 = scalar_select %p270, %s263, 2
      %s272 = smul.addr %s269, 3
      %s273 = sadd.s32 %s271, %s272
      %s274 = smul.addr %s273, 8
      %s275 = scalar_lea.vmem %s0, %s274
      %s276 = smul.u32 2, %s20
      %s277 = ssub.s32 3, %s276
      %p278 = scmp.lt.s32.totalorder %s277, 2
      %s279 = scalar_select %p278, %s277, 2
      %s280 = smul.u32 128, %s279
      %s281 = sadd.s32 %s20, 1
      %s282 = smul.u32 %s281, 2
      %p283 = scmp.lt.s32.totalorder %s19, 1
      %s284 = scalar_select %p283, %s19, 1
      %p285 = scmp.lt.s32.totalorder %s282, 2
      %s286 = scalar_select %p285, %s282, 2
      %s287 = smul.addr %s284, 3
      %s288 = sadd.s32 %s286, %s287
      %s289 = smul.addr %s288, 8
      %s290 = scalar_lea.vmem %s1, %s289
      %s291 = sadd.s32 %s20, 1
      %s292 = smul.u32 %s291, 2
      %s293 = smul.u32 2, %s20
      %p294 = scmp.lt.s32.totalorder %s19, 1
      %s295 = scalar_select %p294, %s19, 1
      %p296 = scmp.lt.s32.totalorder %s293, 1
      %s297 = scalar_select %p296, %s293, 1
      %s298 = smul.addr %s297, 2
      %s299 = smul.addr %s295, 4
      %s300 = sadd.s32 %s298, %s299
      %s301 = smul.addr %s300, 8
      %s302 = scalar_lea.vmem %s4, %s301
      %s303 = smul.u32 2, %s20
      %v304 = vld [vmem:[%s275] sm:$0xff]
      %v305 = vld [vmem:[%s275 + $0x8] sm:$0xff]
      %v306 = vld [vmem:[%s290] sm:$0x3]
      %vm310 = vcmask 1046528
      %v311 = vrot.slane %v304, 1
      %v312 = vrot.slane %v305, 1
      %v313 = vsel %vm310, %v311, %v312
      %v314 = vrot.slane %v306, 1
      %v315 = vsel %vm310, %v312, %v314
      %316 = vrot.lane.b32.xlu0 %v313, 72
      %v317 = vpop.permute.xlu0 %316
      %318 = vrot.lane.b32.xlu0 %v315, 72
      %v319 = vpop.permute.xlu0 %318
      %vm322 = vcmask 1045504
      %v323 = vrot.slane %v304, 2
      %v324 = vrot.slane %v305, 2
      %v325 = vsel %vm322, %v323, %v324
      %v326 = vrot.slane %v306, 2
      %v327 = vsel %vm322, %v324, %v326
      %328 = vrot.lane.b32.xlu0 %v325, 16
      %v329 = vpop.permute.xlu0 %328
      %330 = vrot.lane.b32.xlu0 %v327, 16
      %v331 = vpop.permute.xlu0 %330
      %vm334 = vcmask 588800
      %v335 = vsel %vm334, %v304, %v317
      %v336 = vsel %vm334, %v305, %v319
      %vm337 = vcmask 130048
      %v338 = vsel %vm337, %v317, %v329
      %v339 = vsel %vm337, %v319, %v331
      %v340 = vld [vmem:[%s2] sm:$0xff]
      %v341 = vld [vmem:[%s2 + $0x8] sm:$0xff]
      %v342 = vld [vmem:[%s2 + $0x10] sm:$0xff]
      %v343 = vld [vmem:[%s2 + $0x18] sm:$0xff]
      %v344 = vld [vmem:[%s2 + $0x20] sm:$0xff]
      %v345 = vld [vmem:[%s2 + $0x28] sm:$0xff]
      %v346 = vld [vmem:[%s2 + $0x30] sm:$0xff]
      %v347 = vld [vmem:[%s2 + $0x38] sm:$0xff]
      %v348 = vld [vmem:[%s2 + $0x40] sm:$0xff]
      %v349 = vld [vmem:[%s2 + $0x48] sm:$0xff]
      %v350 = vld [vmem:[%s2 + $0x50] sm:$0xff]
      %v351 = vld [vmem:[%s2 + $0x58] sm:$0xff]
      %v352 = vld [vmem:[%s2 + $0x60] sm:$0xff]
      %v353 = vld [vmem:[%s2 + $0x68] sm:$0xff]
      %v354 = vld [vmem:[%s2 + $0x70] sm:$0xff]
      %v355 = vld [vmem:[%s2 + $0x78] sm:$0xff]
      %v356 = vld [vmem:[%s2 + $0x80] sm:$0xff]
      %v357 = vld [vmem:[%s2 + $0x88] sm:$0xff]
      %v358 = vld [vmem:[%s2 + $0x90] sm:$0xff]
      %v359 = vld [vmem:[%s2 + $0x98] sm:$0xff]
      %v360 = vld [vmem:[%s2 + $0xa0] sm:$0xff]
      %v361 = vld [vmem:[%s2 + $0xa8] sm:$0xff]
      %v362 = vld [vmem:[%s2 + $0xb0] sm:$0xff]
      %v363 = vld [vmem:[%s2 + $0xb8] sm:$0xff]
      %v364 = vld [vmem:[%s2 + $0xc0] sm:$0xff]
      %v365 = vld [vmem:[%s2 + $0xc8] sm:$0xff]
      %v366 = vld [vmem:[%s2 + $0xd0] sm:$0xff]
      %v367 = vld [vmem:[%s2 + $0xd8] sm:$0xff]
      %v368 = vld [vmem:[%s2 + $0xe0] sm:$0xff]
      %v369 = vld [vmem:[%s2 + $0xe8] sm:$0xff]
      %v370 = vld [vmem:[%s2 + $0xf0] sm:$0xff]
      %v371 = vld [vmem:[%s2 + $0xf8] sm:$0xff]
      %v372 = vld [vmem:[%s2 + $0x100] sm:$0xff]
      %v373 = vld [vmem:[%s2 + $0x108] sm:$0xff]
      %v374 = vld [vmem:[%s2 + $0x110] sm:$0xff]
      %v375 = vld [vmem:[%s2 + $0x118] sm:$0xff]
      %v376 = vld [vmem:[%s2 + $0x120] sm:$0xff]
      %v377 = vld [vmem:[%s2 + $0x128] sm:$0xff]
      %v378 = vld [vmem:[%s2 + $0x130] sm:$0xff]
      %v379 = vld [vmem:[%s2 + $0x138] sm:$0xff]
      %v380 = vld [vmem:[%s2 + $0x140] sm:$0xff]
      %v381 = vld [vmem:[%s2 + $0x148] sm:$0xff]
      %v382 = vld [vmem:[%s2 + $0x150] sm:$0xff]
      %v383 = vld [vmem:[%s2 + $0x158] sm:$0xff]
      %v384 = vld [vmem:[%s2 + $0x160] sm:$0xff]
      %v385 = vld [vmem:[%s2 + $0x168] sm:$0xff]
      %v386 = vld [vmem:[%s2 + $0x170] sm:$0xff]
      %v387 = vld [vmem:[%s2 + $0x178] sm:$0xff]
      %v388 = vld [vmem:[%s2 + $0x180] sm:$0xff]
      %v389 = vld [vmem:[%s2 + $0x188] sm:$0xff]
      %v390 = vld [vmem:[%s2 + $0x190] sm:$0xff]
      %v391 = vld [vmem:[%s2 + $0x198] sm:$0xff]
      %v392 = vld [vmem:[%s2 + $0x1a0] sm:$0xff]
      %v393 = vld [vmem:[%s2 + $0x1a8] sm:$0xff]
      %v394 = vld [vmem:[%s3] sm:$0x3]
      %v396 = vlaneseq
      %v397 = vshrl.u32 %v396, 7
      %v398 = vsub.s32 0, %v397
      %v399 = vrot.slane %v394, %v398
      %v400 = vlaneseq
      %v401 = vshrl.u32 %v400, 7
      %v402 = vsub.s32 1, %v401
      %v403 = vrot.slane %v394, %v402
      %vm406 = vcmask 719872
      %v408 = vsel %vm406, %v338, 0
      %v411 = vsel %vm406, %v339, 0
      %413 = vmatprep.subr.mxu0 %v371
      %414 = vmatpush1.msra.mxu0 %v370
      %415 = vmatprep.subr.mxu0 %v369
      %416 = vmatpush1.msra.mxu0 %v368
      %417 = vmatprep.subr.mxu0 %v367
      %418 = vmatpush1.msra.mxu0 %v366
      %419 = vmatprep.subr.mxu0 %v365
      %420 = vmatpush1.msra.mxu0 %v364
      %421 = vmatprep.subr.mxu0 %v363
      %422 = vmatpush1.msra.mxu0 %v362
      %423 = vmatprep.subr.mxu0 %v361
      %424 = vmatpush1.msra.mxu0 %v360
      %425 = vmatprep.subr.mxu0 %v359
      %426 = vmatpush1.msra.mxu0 %v358
      %427 = vmatprep.subr.mxu0 %v357
      %428 = vmatpush1.msra.mxu0 %v356
      %429 = vmatprep.subr.mxu0 %v355
      %430 = vmatpush1.msra.mxu0 %v354
      %431 = vmatprep.subr.mxu0 %v353
      %432 = vmatpush1.msra.mxu0 %v352
      %433 = vmatprep.subr.mxu0 %v351
      %434 = vmatpush1.msra.mxu0 %v350
      %435 = vmatprep.subr.mxu0 %v349
      %436 = vmatpush1.msra.mxu0 %v348
      %437 = vmatprep.subr.mxu0 %v347
      %438 = vmatpush1.msra.mxu0 %v346
      %439 = vmatprep.subr.mxu0 %v345
      %440 = vmatpush1.msra.mxu0 %v344
      %441 = vmatprep.subr.mxu0 %v343
      %442 = vmatpush1.msra.mxu0 %v342
      %443 = vmatprep.subr.mxu0 %v341
      %444 = vmatpush1.msra.mxu0 %v340
      %445 = vmatprep.subr.mxu0 0.0
      %446 = vmatpush2.msra.mxu0 0.0
      %447 = vmatprep.subr.mxu0 0.0
      %448 = vmatpush2.msra.mxu0 0.0
      %449 = vmatprep.subr.mxu0 0.0
      %450 = vmatpush2.msra.mxu0 0.0
      %451 = vmatprep.subr.mxu0 0.0
      %452 = vmatpush2.msra.mxu0 0.0
      %453 = vmatprep.subr.mxu0 0.0
      %454 = vmatpush2.msra.mxu0 0.0
      %455 = vmatprep.subr.mxu0 %v393
      %456 = vmatpush2.msra.mxu0 %v392
      %457 = vmatprep.subr.mxu0 %v391
      %458 = vmatpush2.msra.mxu0 %v390
      %459 = vmatprep.subr.mxu0 %v389
      %460 = vmatpush2.msra.mxu0 %v388
      %461 = vmatprep.subr.mxu0 %v387
      %462 = vmatpush2.msra.mxu0 %v386
      %463 = vmatprep.subr.mxu0 %v385
      %464 = vmatpush2.msra.mxu0 %v384
      %465 = vmatprep.subr.mxu0 %v383
      %466 = vmatpush2.msra.mxu0 %v382
      %467 = vmatprep.subr.mxu0 %v381
      %468 = vmatpush2.msra.mxu0 %v380
      %469 = vmatprep.subr.mxu0 %v379
      %470 = vmatpush2.msra.mxu0 %v378
      %471 = vmatprep.subr.mxu0 %v377
      %472 = vmatpush2.msra.mxu0 %v376
      %473 = vmatprep.subr.mxu0 %v375
      %474 = vmatpush2.msra.mxu0 %v374
      %475 = vmatprep.subr.mxu0 %v373
      %476 = vmatpush2.msra.mxu0 %v372
      %477 = vmatprep.mubr.f32.mxu0 %v408
      %478 = vmatmul.mubr.f32.gmra.mxu0 %v335
      %v479 = vpop.f32.mrf.mxu0
      %v480 = vadd.f32 %v399, %v479
      %v481 = vpop.f32.mrf.mxu0
      %v482 = vadd.f32 %v403, %v481
      %483 = vmatprep.mubr.f32.mxu0 %v411
      %484 = vmatmul.mubr.f32.gmra.mxu0 %v336
      %v485 = vpop.f32.mrf.mxu0
      %v486 = vadd.f32 %v399, %v485
      %v487 = vpop.f32.mrf.mxu0
      %v488 = vadd.f32 %v403, %v487
      %489 = vdwg.mxu0
      %490 = vst [vmem:[%s302] sm:$0xff] %v480
      %491 = vst [vmem:[%s302 + $0x8] sm:$0xff] %v482
      %492 = vst [vmem:[%s302 + $0x10] sm:$0xff] %v486
      %493 = vst [vmem:[%s302 + $0x18] sm:$0xff] %v488
      %s494 = smul.u32 2, %s20
      %p495 = scmp.lt.s32.totalorder %s19, 1
      %s496 = scalar_select %p495, %s19, 1
      %p497 = scmp.lt.s32.totalorder %s494, 1
      %s498 = scalar_select %p497, %s494, 1
      %s499 = smul.addr %s498, 2
      %s500 = smul.addr %s496, 4
      %s501 = sadd.s32 %s499, %s500
      %s502 = smul.addr %s501, 8
      %s503 = scalar_lea.vmem %s4, %s502
      // Predicated region
      $region37: #{upsample_forward.1} parent=35 // pred_check
        %p504 = pneg %p149
      $region38: #{upsample_forward.1} parent=35 // pred_check_branch
        %506 = sbr.rel (%p504) target = $region40
      $region39: #{upsample_forward.1} parent=35 // pred_region
        %s507 = smul.u32 2, %s20
      $region40: #{upsample_forward.1} parent=35 // pred_fallthru
        _
    $region36: #{upsample_forward.1} parent=5 // pred_fallthru
      _
    %p508 = scmp.le.s32.totalorder 2, %s10
    // Predicated region
    $region41: #{upsample_forward.1} parent=5 // pred_check
      %p509 = pneg %p508
    $region42: #{upsample_forward.1} parent=5 // pred_check_branch
      %511 = sbr.rel (%p509) target = $region44
    $region43: #{upsample_forward.1} parent=5 // pred_region
      %s512 = ssub.s32 %s10, 2
      // Predicated region
      $region45: #{upsample_forward.1} parent=43 // pred_check
        %p513 = pneg %p155
      $region46: #{upsample_forward.1} parent=43 // pred_check_branch
        %515 = sbr.rel (%p513) target = $region48
      $region47: #{upsample_forward.1} parent=43 // pred_region
        %s516 = smul.u32 2, %s22
        %p517 = scmp.lt.s32.totalorder %s21, 1
        %s518 = scalar_select %p517, %s21, 1
        %p519 = scmp.lt.s32.totalorder %s516, 1
        %s520 = scalar_select %p519, %s516, 1
        %s521 = smul.addr %s520, 2
        %s522 = smul.addr %s518, 4
        %s523 = sadd.s32 %s521, %s522
        %s524 = smul.addr %s523, 8
        %s525 = scalar_lea.vmem %s4, %s524
      $region48: #{upsample_forward.1} parent=43 // pred_fallthru
        _
    $region44: #{upsample_forward.1} parent=5 // pred_fallthru
      _
  $region6: #{upsample_forward.1} parent=0 // loop_footer
    %s14 = sadd.s32 1, %s10
  $region7: #{upsample_forward.1} parent=0 // loop_footer_branch
    %9 = sbr.rel target = $region3
  $region8: #{upsample_forward.1} parent=0 // loop_exit
    _

</llo_original>
